<compile_context>
chip_gen: v7x
topology: tpu7x:2x2x1
jax: 0.10.0
libtpu: 0.0.40
codegen_flags: <defaults>
</compile_context>

<pallas_src>
import jax
import jax.numpy as jnp
from jax.experimental import pallas as pl
from jax.experimental.pallas import tpu as pltpu


def _round_up(x, m):
    return (x + m - 1) // m * m


# ----------------------------- kernels ---------------------------------------------


def _mog_fused_kernel(r_ref, params_ref, out_ref):
    # One lane-dense MXU matmul; log_sigma rides in lane D of the padded params slab.
    out_ref[...] = jnp.dot(
        r_ref[...], params_ref[...], preferred_element_type=jnp.float32
    ).astype(out_ref.dtype)


def _mog_split_kernel(r_ref, mus_ref, ls_row_ref, mu_ref, lsd_ref):
    # mus already lane-dense (D % 128 == 0): fusing the width-1 log_sigma column would
    # cost an extra 128-lane tile, so log_sigma_dec is a VPU reduction instead.
    r = r_ref[...]
    mu_ref[...] = jnp.dot(
        r, mus_ref[...], preferred_element_type=jnp.float32
    ).astype(mu_ref.dtype)
    rf = r.astype(jnp.float32)
    ls = jnp.sum(rf * ls_row_ref[...].astype(jnp.float32), axis=1, keepdims=True)
    lsd_ref[...] = ls.astype(lsd_ref.dtype)


# ----------------------------- parameter prep (done ONCE at init) ------------------


def init_mog_params(key, N, x_min, x_max, D):
    # Deterministic synthetic stand-in for initialize_MOG_params (kmeans centers).
    # TODO(synk): sklearn KMeans init has no Pallas/JAX equivalent; centers are synthesized.
    mus = jax.random.uniform(key, (N, D), jnp.float32, minval=x_min, maxval=x_max)
    log_sigmas = jnp.log(jnp.ones((N,), jnp.float32) * (x_max - x_min) / N)[:, None]
    qs = jnp.ones((N,), jnp.float32)[:, None]
    return qs, mus, log_sigmas


def prepare_mog_decoder_params(mus, log_sigmas, *, compute_dtype=None):
    """Build the static, lane-dense parameter slab once (hoisted out of forward)."""
    N, D = mus.shape
    dtype = jnp.dtype(compute_dtype) if compute_dtype is not None else mus.dtype
    if D % 128 != 0:
        # A pad lane already exists past D -> stash log_sigma there (free), pad to 128.
        Dp = _round_up(D + 1, 128)
        params = jnp.concatenate([mus, log_sigmas], axis=1)
        if Dp != D + 1:
            params = jnp.pad(params, ((0, 0), (0, Dp - (D + 1))))
        ls_row = None
    else:
        # mus is already lane-dense: keep it as-is, log_sigma handled in-kernel (VPU).
        params = mus
        ls_row = log_sigmas.reshape(1, N).astype(dtype)
    params = params.astype(dtype)
    return {"params": params, "ls_row": ls_row, "N": N, "D": D}


# ----------------------------- forward ---------------------------------------------


def mog_decoder_forward(r, prepared, *, block_b=512, out_dtype=None):
    """Returns (mu_dec [B, D], log_sigma_dec [B, 1]) == (r @ mus, r @ log_sigmas)."""
    B, N = r.shape
    params = prepared["params"]
    ls_row = prepared["ls_row"]
    D = prepared["D"]
    assert params.shape[0] == N, "r and mus disagree on the number of components"
    assert block_b % 8 == 0, "block_b must be a multiple of 8 (sublane constraint)"
    out_dtype = jnp.dtype(out_dtype) if out_dtype is not None else r.dtype

    # Bounded batch tile + cdiv grid (partial last block masked by Pallas).
    tm = B if B <= block_b else block_b
    grid = (pl.cdiv(B, tm),)

    r_bytes = B * N * r.dtype.itemsize
    params_bytes = params.size * params.dtype.itemsize

    if ls_row is None:
        # Fused path (D % 128 != 0): one lane-dense MXU matmul, one unmasked output slab.
        Dp = params.shape[1]
        out = pl.pallas_call(
            _mog_fused_kernel,
            out_shape=jax.ShapeDtypeStruct((B, Dp), out_dtype),
            grid_spec=pltpu.PrefetchScalarGridSpec(
                num_scalar_prefetch=0,
                grid=grid,
                in_specs=[
                    pl.BlockSpec((tm, N), lambda i: (i, 0)),            # r batch tile
                    pl.BlockSpec(memory_space=pltpu.MemorySpace.VMEM),  # params: resident once
                ],
                out_specs=pl.BlockSpec((tm, Dp), lambda i: (i, 0)),
            ),
            compiler_params=pltpu.CompilerParams(
                dimension_semantics=("parallel",),      # shard batch across TCs (v7x)
            ),
            cost_estimate=pl.CostEstimate(
                flops=2 * B * N * (D + 1),
                transcendentals=0,
                bytes_accessed=r_bytes + params_bytes + B * Dp * out_dtype.itemsize,
            ),
        )(r, params)
        return out[:, :D], out[:, D : D + 1]

    # Split path (D % 128 == 0): lane-dense mus matmul + in-kernel VPU reduction for ls.
    mu, ls = pl.pallas_call(
        _mog_split_kernel,
        out_shape=(
            jax.ShapeDtypeStruct((B, D), out_dtype),
            jax.ShapeDtypeStruct((B, 1), out_dtype),
        ),
        grid_spec=pltpu.PrefetchScalarGridSpec(
            num_scalar_prefetch=0,
            grid=grid,
            in_specs=[
                pl.BlockSpec((tm, N), lambda i: (i, 0)),            # r batch tile
                pl.BlockSpec(memory_space=pltpu.MemorySpace.VMEM),  # mus [N, D] resident
                pl.BlockSpec(memory_space=pltpu.MemorySpace.VMEM),  # log_sigmas as [1, N]
            ],
            out_specs=(
                pl.BlockSpec((tm, D), lambda i: (i, 0)),
                pl.BlockSpec((tm, 1), lambda i: (i, 0)),
            ),
        ),
        compiler_params=pltpu.CompilerParams(
            dimension_semantics=("parallel",),
        ),
        cost_estimate=pl.CostEstimate(
            flops=2 * B * N * (D + 1),
            transcendentals=0,
            bytes_accessed=(
                r_bytes
                + params_bytes
                + ls_row.size * ls_row.dtype.itemsize
                + B * (D + 1) * out_dtype.itemsize
            ),
        ),
    )(r, params, ls_row)
    return mu, ls


class MoGDecoder:
    """JAX/Pallas port of the PyTorch MoGDecoder: forward(r) = (r @ mus, r @ log_sigmas)."""

    def __init__(self, N, x_min, x_max, D, *, key, compute_dtype=None, block_b=512):
        # TODO(synk): sklearn KMeans fit of `x` has no Pallas/JAX equivalent; centers synthesized.
        self.qs, self.mus, self.log_sigmas = init_mog_params(key, N, x_min, x_max, D)
        # Fused / lane-dense parameter slab built ONCE and cached (not per forward call).
        self._prepared = prepare_mog_decoder_params(
            self.mus, self.log_sigmas, compute_dtype=compute_dtype
        )
        self.block_b = block_b

    def forward(self, r, out_dtype=None):
        return mog_decoder_forward(
            r, self._prepared, block_b=self.block_b, out_dtype=out_dtype
        )

    __call__ = forward


if __name__ == "__main__":
    key = jax.random.PRNGKey(0)
    k_r, k_mu, k_mu2 = jax.random.split(key, 3)

    B, N = 8, 32
    x_min, x_max = -1.0, 1.0

    # Responsibilities r: softmax over N so rows are a convex combination.
    r = jax.nn.softmax(jax.random.normal(k_r, (B, N), jnp.float32), axis=-1)

    # ---- Path 1: D % 128 != 0 (log_sigma fused into an existing pad lane) ----------
    D1 = 16
    dec1 = MoGDecoder(N, x_min, x_max, D1, key=k_mu)
    mu1, ls1 = dec1(r)
    jax.block_until_ready((mu1, ls1))
    assert mu1.shape == (B, D1) and ls1.shape == (B, 1)
    assert jnp.allclose(mu1, r @ dec1.mus, atol=1e-5)
    assert jnp.allclose(ls1, r @ dec1.log_sigmas, atol=1e-5)

    # ---- Path 2: D % 128 == 0 (lane-dense mus; log_sigma via in-kernel reduction) ---
    D2 = 128
    dec2 = MoGDecoder(N, x_min, x_max, D2, key=k_mu2)
    mu2, ls2 = dec2(r)
    jax.block_until_ready((mu2, ls2))
    assert mu2.shape == (B, D2) and ls2.shape == (B, 1)
    assert jnp.allclose(mu2, r @ dec2.mus, atol=1e-5)
    assert jnp.allclose(ls2, r @ dec2.log_sigmas, atol=1e-5)

    # ---- Reduced-precision path: params cast ONCE at init; r already bf16 upstream ---
    dec_bf = MoGDecoder(N, x_min, x_max, D1, key=k_mu, compute_dtype=jnp.bfloat16)
    r_bf = r.astype(jnp.bfloat16)  # stands in for an upstream producer emitting bf16
    mu_bf, ls_bf = dec_bf(r_bf)
    jax.block_until_ready((mu_bf, ls_bf))
    assert mu_bf.dtype == jnp.bfloat16 and ls_bf.dtype == jnp.bfloat16
    assert jnp.allclose(mu_bf.astype(jnp.float32), r @ dec1.mus, atol=5e-2)
    assert jnp.allclose(ls_bf.astype(jnp.float32), r @ dec1.log_sigmas, atol=5e-2)

    print("KERNEL_OK")
</pallas_src>

<mosaic_0001>
module attributes {stable_mosaic.version = 11 : i64} {
  func.func @_mog_fused_kernel(%arg0: i32, %arg1: memref<8x32xf32, #tpu.memory_space<vmem>>, %arg2: memref<32x128xf32, #tpu.memory_space<vmem>>, %arg3: memref<8x128xf32, #tpu.memory_space<vmem>>) attributes {dimension_semantics = [#tpu.dimension_semantics<parallel>], iteration_bounds = array<i64: 1>, scalar_prefetch = 0 : i64, scratch_operands = 0 : i64, tpu.core_type = #tpu.core_type<tc>, window_params = [{transform_indices = @transform_0, window_bounds = array<i64: 8, 32>}, {pipeline_mode = #tpu.pipeline_mode<synchronous>, transform_indices = @transform_1, window_bounds = array<i64: 32, 128>}, {transform_indices = @transform_2, window_bounds = array<i64: 8, 128>}]} {
    %c0 = arith.constant 0 : index
    %c0_0 = arith.constant 0 : index
    %0 = vector.load %arg1[%c0, %c0_0] : memref<8x32xf32, #tpu.memory_space<vmem>>, vector<8x32xf32>
    %c0_1 = arith.constant 0 : index
    %c0_2 = arith.constant 0 : index
    %1 = vector.load %arg2[%c0_1, %c0_2] : memref<32x128xf32, #tpu.memory_space<vmem>>, vector<32x128xf32>
    %cst = arith.constant dense<0.000000e+00> : vector<8x128xf32>
    %2 = tpu.matmul %0, %1, %cst {dimension_numbers = #tpu.dot_dimension_numbers<[1], [0], [0], [1], [0, 0, 1, 1], [], []>} : vector<8x32xf32>, vector<32x128xf32>, vector<8x128xf32> -> vector<8x128xf32>
    %c0_3 = arith.constant 0 : index
    %c0_4 = arith.constant 0 : index
    %3 = vector.load %arg3[%c0_3, %c0_4] : memref<8x128xf32, #tpu.memory_space<vmem>>, vector<8x128xf32>
    tpu.vector_store %arg3[%c0_3, %c0_4], %2 {strides = array<i32>} : memref<8x128xf32, #tpu.memory_space<vmem>>, vector<8x128xf32>,
    return
  }
  func.func @transform_0(%arg0: i32) -> (i32, i32) {
    %c0_i32 = arith.constant 0 : i32
    %c0_i32_0 = arith.constant 0 : i32
    return %arg0, %c0_i32 : i32, i32
  }
  func.func @transform_1(%arg0: i32) -> (i32, i32) {
    %c0_i32 = arith.constant 0 : i32
    %c0_i32_0 = arith.constant 0 : i32
    %c0_i32_1 = arith.constant 0 : i32
    return %c0_i32, %c0_i32_0 : i32, i32
  }
  func.func @transform_2(%arg0: i32) -> (i32, i32) {
    %c0_i32 = arith.constant 0 : i32
    %c0_i32_0 = arith.constant 0 : i32
    return %arg0, %c0_i32 : i32, i32
  }
}

</mosaic_0001>

<llo_original>
// kernel: tpu_custom_call.1
$region0: #{tpu_custom_call.1}
  #allocation0 [shape = 'u32[]', space=smem, size = 0x4, offset = 0x4, fixed_abs, tag = 'smem constant byte address 0x4 - core index']
  #allocation1 [shape = 'u32[144,128]{1,0:T(1,128)}', space=vmem, size = 0x12000, scoped, tag = 'internal scratch']
  %s0 = inlined_call_operand.hbm [shape: f32[8,32], index: 0, kind: input, shape index: {}]
  %s1 = inlined_call_operand.hbm [shape: f32[32,128], index: 1, kind: input, shape index: {}]
  %s2 = inlined_call_operand.hbm [shape: f32[8,128], index: 2, kind: output, shape index: {}]
  %s3 = sld [smem:[#allocation0]]
  $region26: #{tpu_custom_call.1} parent=0
    _
  %s5 = ssub.s32 1, %s3
  %s6 = scalar_select 0, %s5, %s3
  $region1: #{tpu_custom_call.1} parent=0
    #allocation2 [shape = 'u8[4096]{0}', space=vmem, size = 0x1000, scoped, tag = 'input window, operand 0, single buffered']
    #allocation3 [shape = 's32[1]{0}', space=sflag, size = 0x4, scoped, tag = 'scoped memory for tpu_custom_call.1']
    #allocation4 [shape = 's32[1]{0}', space=sflag, size = 0x4, scoped, tag = 'scoped memory for tpu_custom_call.1']
    #allocation5 [shape = 'u8[16384]{0}', space=vmem, size = 0x4000, scoped, tag = 'input window, operand 1, single buffered']
    #allocation6 [shape = 's32[1]{0}', space=sflag, size = 0x4, scoped, tag = 'scoped memory for tpu_custom_call.1']
    #allocation7 [shape = 'u8[4096]{0}', space=vmem, size = 0x1000, scoped, tag = 'output window, operand 0, single buffered']
    %7 = vsyncpa [#allocation3], 0
    %8 = vsyncpa [#allocation6], 0
    %9 = vsyncpa [#allocation4], 0
    // Predicated region
    $region2: #{tpu_custom_call.1} parent=1 // pred_check
      _
    $region3: #{tpu_custom_call.1} parent=1 // pred_check_branch
      %11 = sbr.rel (0) target = $region5
    $region4: #{tpu_custom_call.1} parent=1 // pred_region
      %s13 = ssub.s32 128, 128
      %14 = vsyncadd [#allocation3], %s13
      %s16 = sshll.u32 [#allocation2], 4
      %s17 = int_to_ptr.vmem [resolvable:$true] %s16
      %19 = dma.hbm_to_vmem [thread:$0]  %s0, 128, %s17, [#allocation3]
    $region5: #{tpu_custom_call.1} parent=1 // pred_fallthru
      _
    // Predicated region
    $region6: #{tpu_custom_call.1} parent=1 // pred_check
      _
    $region7: #{tpu_custom_call.1} parent=1 // pred_check_branch
      %21 = sbr.rel (0) target = $region9
    $region8: #{tpu_custom_call.1} parent=1 // pred_region
      %s23 = ssub.s32 512, 512
      %24 = vsyncadd [#allocation6], %s23
      %s25 = sshll.u32 [#allocation5], 4
      %s26 = int_to_ptr.vmem [resolvable:$true] %s25
      %31 = dma.hbm_to_vmem [thread:$0]  %s1, 512, %s26, [#allocation6], 128, 128, 8
    $region9: #{tpu_custom_call.1} parent=1 // pred_fallthru
      _
    // Predicated region
    $region10: #{tpu_custom_call.1} parent=1 // pred_check
      _
    $region11: #{tpu_custom_call.1} parent=1 // pred_check_branch
      %33 = sbr.rel (0) target = $region13
    $region12: #{tpu_custom_call.1} parent=1 // pred_region
      %34 = dma.done [#allocation3], 128
    $region13: #{tpu_custom_call.1} parent=1 // pred_fallthru
      _
    // Predicated region
    $region14: #{tpu_custom_call.1} parent=1 // pred_check
      _
    $region15: #{tpu_custom_call.1} parent=1 // pred_check_branch
      %36 = sbr.rel (0) target = $region17
    $region16: #{tpu_custom_call.1} parent=1 // pred_region
      %37 = dma.done [#allocation6], 512
    $region17: #{tpu_custom_call.1} parent=1 // pred_fallthru
      _
    %v38 = vld [vmem:[#allocation2] sm:$0xff]
    %v39 = vld [vmem:[#allocation5] sm:$0xff]
    %v40 = vld [vmem:[#allocation5 + $0x8] sm:$0xff]
    %v41 = vld [vmem:[#allocation5 + $0x10] sm:$0xff]
    %v42 = vld [vmem:[#allocation5 + $0x18] sm:$0xff]
    %vm43 = vcmask 261120
    %v45 = vsel %vm43, %v38, 0
    %47 = vmatprep.subr.mxu0 0.0
    %48 = vmatpush1.msra.mxu0 %v39
    %49 = vmatprep.subr.mxu0 0.0
    %50 = vmatpush1.msra.mxu0 %v40
    %51 = vmatprep.subr.mxu0 0.0
    %52 = vmatpush1.msra.mxu0 %v41
    %53 = vmatprep.subr.mxu0 0.0
    %54 = vmatpush1.msra.mxu0 %v42
    %55 = vmatprep.subr.mxu0 0.0
    %56 = vmatpush1.msra.mxu0 0.0
    %57 = vmatprep.subr.mxu0 0.0
    %58 = vmatpush1.msra.mxu0 0.0
    %59 = vmatprep.subr.mxu0 0.0
    %60 = vmatpush1.msra.mxu0 0.0
    %61 = vmatprep.subr.mxu0 0.0
    %62 = vmatpush1.msra.mxu0 0.0
    %63 = vmatprep.subr.mxu0 0.0
    %64 = vmatpush1.msra.mxu0 0.0
    %65 = vmatprep.subr.mxu0 0.0
    %66 = vmatpush1.msra.mxu0 0.0
    %67 = vmatprep.subr.mxu0 0.0
    %68 = vmatpush1.msra.mxu0 0.0
    %69 = vmatprep.subr.mxu0 0.0
    %70 = vmatpush1.msra.mxu0 0.0
    %71 = vmatprep.subr.mxu0 0.0
    %72 = vmatpush1.msra.mxu0 0.0
    %73 = vmatprep.subr.mxu0 0.0
    %74 = vmatpush1.msra.mxu0 0.0
    %75 = vmatprep.subr.mxu0 0.0
    %76 = vmatpush1.msra.mxu0 0.0
    %77 = vmatprep.subr.mxu0 0.0
    %78 = vmatpush1.msra.mxu0 0.0
    %79 = vmatprep.subr.mxu0 0.0
    %80 = vmatpush1.msra.mxu0 0.0
    %81 = vmatprep.subr.mxu0 0.0
    %82 = vmatpush1.msra.mxu0 0.0
    %83 = vmatprep.subr.mxu0 0.0
    %84 = vmatpush1.msra.mxu0 0.0
    %85 = vmatprep.subr.mxu0 0.0
    %86 = vmatpush1.msra.mxu0 0.0
    %87 = vmatprep.subr.mxu0 0.0
    %88 = vmatpush1.msra.mxu0 0.0
    %89 = vmatprep.subr.mxu0 0.0
    %90 = vmatpush1.msra.mxu0 0.0
    %91 = vmatprep.subr.mxu0 0.0
    %92 = vmatpush1.msra.mxu0 0.0
    %93 = vmatprep.subr.mxu0 0.0
    %94 = vmatpush1.msra.mxu0 0.0
    %95 = vmatprep.subr.mxu0 0.0
    %96 = vmatpush1.msra.mxu0 0.0
    %97 = vmatprep.subr.mxu0 0.0
    %98 = vmatpush1.msra.mxu0 0.0
    %99 = vmatprep.subr.mxu0 0.0
    %100 = vmatpush1.msra.mxu0 0.0
    %101 = vmatprep.subr.mxu0 0.0
    %102 = vmatpush1.msra.mxu0 0.0
    %103 = vmatprep.subr.mxu0 0.0
    %104 = vmatpush1.msra.mxu0 0.0
    %105 = vmatprep.subr.mxu0 0.0
    %106 = vmatpush1.msra.mxu0 0.0
    %107 = vmatprep.subr.mxu0 0.0
    %108 = vmatpush1.msra.mxu0 0.0
    %109 = vmatprep.subr.mxu0 0.0
    %110 = vmatpush1.msra.mxu0 0.0
    %111 = vmatprep.mubr.f32.mxu0 0.0
    %112 = vmatmul.mubr.f32.gmra.mrb[0].mxu0 %v45
    %v113 = vpop.f32.mrb[0].mxu0
    %v114 = vadd.f32 0.0, %v113
    %v115 = vpop.f32.mrb[0].mxu0
    %116 = vdwg.mxu0
    %117 = vst [vmem:[#allocation7] sm:$0xff] %v114
    // Predicated region
    $region18: #{tpu_custom_call.1} parent=1 // pred_check
      _
    $region19: #{tpu_custom_call.1} parent=1 // pred_check_branch
      %119 = sbr.rel (0) target = $region21
    $region20: #{tpu_custom_call.1} parent=1 // pred_region
      %s121 = ssub.s32 128, 128
      %122 = vsyncadd [#allocation4], %s121
      %s124 = sshll.u32 [#allocation7], 4
      %s125 = int_to_ptr.vmem [resolvable:$true] %s124
      %127 = dma.vmem_to_hbm [thread:$0]  %s125, 128, %s2, [#allocation4]
    $region21: #{tpu_custom_call.1} parent=1 // pred_fallthru
      _
    // Predicated region
    $region22: #{tpu_custom_call.1} parent=1 // pred_check
      _
    $region23: #{tpu_custom_call.1} parent=1 // pred_check_branch
      %129 = sbr.rel (0) target = $region25
    $region24: #{tpu_custom_call.1} parent=1 // pred_region
      %130 = dma.done [#allocation4], 128
    $region25: #{tpu_custom_call.1} parent=1 // pred_fallthru
      _
    %131 = vsyncpa [#allocation3], 1
    %132 = vsyncpa [#allocation6], 1
    %133 = vsyncpa [#allocation4], 1

</llo_original>
